<compile_context>
chip_gen: v7x
topology: tpu7x:2x2x1
jax: 0.10.0
libtpu: 0.0.40
codegen_flags: <defaults>
</compile_context>

<pallas_src>
import jax
import jax.numpy as jnp
from jax.experimental import pallas as pl
from jax.experimental.pallas import tpu as pltpu


# Lane-dense slab width (multiple of 128) and max rows per tile.
_LANES = 512
_MAX_TILE_ROWS = 1024          # 1024 x 512 x 4B = 2 MiB per f32 buffer
_SMALL_BYTES = 1 << 20         # below 1 MiB, let XLA fuse x + 1 instead


def _add_one_kernel(x_ref, o_ref):
    # Pure VPU elementwise hot path, one full tile per grid step.
    o_ref[...] = x_ref[...] + jnp.asarray(1, dtype=x_ref.dtype)


def nn_demo_forward(x, *, force_pallas=False):
    """Pallas equivalent of nnDemo.forward: returns x + 1 (same shape/dtype)."""
    orig_shape = x.shape
    n = int(x.size)

    if n == 0:
        return x + jnp.asarray(1, dtype=x.dtype)

    # Dispatch policy: a standalone kernel for x+1 is pure overhead at tiny
    # sizes; let XLA fuse it unless the caller explicitly wants the kernel.
    if not force_pallas and n * x.dtype.itemsize < _SMALL_BYTES:
        return x + jnp.asarray(1, dtype=x.dtype)

    # ---- Lane-dense layout plumbing -------------------------------------
    flat = x.reshape(-1)
    rows = pl.cdiv(n, _LANES)                      # rows of the (rows, 512) slab

    if rows <= _MAX_TILE_ROWS:
        tile_rows = rows                           # single block == full array dims
        rows_padded = rows
    else:
        tile_rows = _MAX_TILE_ROWS                 # divisible by 8 -> valid block
        rows_padded = pl.cdiv(rows, tile_rows) * tile_rows

    padded_n = rows_padded * _LANES
    if padded_n != n:
        flat = jnp.pad(flat, (0, padded_n - n))

    x2 = flat.reshape(rows_padded, _LANES)
    grid = (rows_padded // tile_rows,)

    out2 = pl.pallas_call(
        _add_one_kernel,
        out_shape=jax.ShapeDtypeStruct((rows_padded, _LANES), x2.dtype),
        grid=grid,
        in_specs=[pl.BlockSpec((tile_rows, _LANES), lambda i: (i, 0))],
        out_specs=pl.BlockSpec((tile_rows, _LANES), lambda i: (i, 0)),
        compiler_params=pltpu.CompilerParams(
            # Row tiles are independent -> shard across TCs on v7x megacore.
            dimension_semantics=("parallel",)
        ),
    )(x2)

    out_flat = out2.reshape(-1)
    if padded_n != n:
        out_flat = out_flat[:n]
    return out_flat.reshape(orig_shape)


if __name__ == "__main__":
    key = jax.random.PRNGKey(0)

    # Primary demo input, NCHW-style, consistent with a generic nn.Module.
    x = jax.random.normal(key, (2, 4, 16, 16), dtype=jnp.float32)
    y = nn_demo_forward(x, force_pallas=True)
    jax.block_until_ready(y)
    assert y.shape == x.shape and y.dtype == x.dtype
    assert jnp.allclose(y, x + 1.0), "mismatch vs reference input + 1"

    # Multi-tile path (rows > tile_rows) to exercise the row-tiled grid.
    k1, k2 = jax.random.split(key)
    x_big = jax.random.normal(k1, (4, 4, 256, 256), dtype=jnp.float32)
    y_big = nn_demo_forward(x_big, force_pallas=True)
    jax.block_until_ready(y_big)
    assert jnp.allclose(y_big, x_big + 1.0), "multi-tile mismatch"

    # Ragged size (not a multiple of 512) to exercise the pad/slice path.
    x_ragged = jax.random.normal(k2, (3, 5, 7, 11), dtype=jnp.float32)
    y_ragged = nn_demo_forward(x_ragged, force_pallas=True)
    jax.block_until_ready(y_ragged)
    assert jnp.allclose(y_ragged, x_ragged + 1.0), "ragged mismatch"

    print("KERNEL_OK")
</pallas_src>

<mosaic_0001>
module attributes {stable_mosaic.version = 11 : i64} {
  func.func @_add_one_kernel(%arg0: i32, %arg1: memref<4x512xf32, #tpu.memory_space<vmem>>, %arg2: memref<4x512xf32, #tpu.memory_space<vmem>>) attributes {dimension_semantics = [#tpu.dimension_semantics<parallel>], iteration_bounds = array<i64: 1>, scalar_prefetch = 0 : i64, scratch_operands = 0 : i64, tpu.core_type = #tpu.core_type<tc>, window_params = [{transform_indices = @transform_0, window_bounds = array<i64: 4, 512>}, {transform_indices = @transform_1, window_bounds = array<i64: 4, 512>}]} {
    %c0 = arith.constant 0 : index
    %c0_0 = arith.constant 0 : index
    %0 = vector.load %arg1[%c0, %c0_0] : memref<4x512xf32, #tpu.memory_space<vmem>>, vector<4x512xf32>
    %cst = arith.constant 1.000000e+00 : f32
    %1 = vector.broadcast %cst : f32 to vector<4x512xf32>
    %2 = arith.addf %0, %1 : vector<4x512xf32>
    %c0_1 = arith.constant 0 : index
    %c0_2 = arith.constant 0 : index
    %3 = vector.load %arg2[%c0_1, %c0_2] : memref<4x512xf32, #tpu.memory_space<vmem>>, vector<4x512xf32>
    tpu.vector_store %arg2[%c0_1, %c0_2], %2 {strides = array<i32>} : memref<4x512xf32, #tpu.memory_space<vmem>>, vector<4x512xf32>,
    return
  }
  func.func @transform_0(%arg0: i32) -> (i32, i32) {
    %c0_i32 = arith.constant 0 : i32
    %c0_i32_0 = arith.constant 0 : i32
    return %arg0, %c0_i32 : i32, i32
  }
  func.func @transform_1(%arg0: i32) -> (i32, i32) {
    %c0_i32 = arith.constant 0 : i32
    %c0_i32_0 = arith.constant 0 : i32
    return %arg0, %c0_i32 : i32, i32
  }
}

</mosaic_0001>

<llo_original>
// kernel: tpu_custom_call.1
$region0: #{tpu_custom_call.1}
  #allocation0 [shape = 'u32[]', space=smem, size = 0x4, offset = 0x4, fixed_abs, tag = 'smem constant byte address 0x4 - core index']
  #allocation1 [shape = 'u32[144,128]{1,0:T(1,128)}', space=vmem, size = 0x12000, scoped, tag = 'internal scratch']
  %s0 = inlined_call_operand.hbm [shape: f32[4,512], index: 0, kind: input, shape index: {}]
  %s1 = inlined_call_operand.hbm [shape: f32[4,512], index: 1, kind: output, shape index: {}]
  %s2 = sld [smem:[#allocation0]]
  $region18: #{tpu_custom_call.1} parent=0
    _
  %s4 = ssub.s32 1, %s2
  %s5 = scalar_select 0, %s4, %s2
  $region1: #{tpu_custom_call.1} parent=0
    #allocation2 [shape = 'u8[8192]{0}', space=vmem, size = 0x2000, scoped, tag = 'input window, operand 0, single buffered']
    #allocation3 [shape = 's32[1]{0}', space=sflag, size = 0x4, scoped, tag = 'scoped memory for tpu_custom_call.1']
    #allocation4 [shape = 's32[1]{0}', space=sflag, size = 0x4, scoped, tag = 'scoped memory for tpu_custom_call.1']
    #allocation5 [shape = 'u8[8192]{0}', space=vmem, size = 0x2000, scoped, tag = 'output window, operand 0, single buffered']
    %6 = vsyncpa [#allocation3], 0
    %7 = vsyncpa [#allocation4], 0
    // Predicated region
    $region2: #{tpu_custom_call.1} parent=1 // pred_check
      _
    $region3: #{tpu_custom_call.1} parent=1 // pred_check_branch
      %9 = sbr.rel (0) target = $region5
    $region4: #{tpu_custom_call.1} parent=1 // pred_region
      %s11 = ssub.s32 256, 256
      %12 = vsyncadd [#allocation3], %s11
      %s14 = sshll.u32 [#allocation2], 4
      %s15 = int_to_ptr.vmem [resolvable:$true] %s14
      %17 = dma.hbm_to_vmem [thread:$0]  %s0, 256, %s15, [#allocation3]
    $region5: #{tpu_custom_call.1} parent=1 // pred_fallthru
      _
    // Predicated region
    $region6: #{tpu_custom_call.1} parent=1 // pred_check
      _
    $region7: #{tpu_custom_call.1} parent=1 // pred_check_branch
      %19 = sbr.rel (0) target = $region9
    $region8: #{tpu_custom_call.1} parent=1 // pred_region
      %20 = dma.done [#allocation3], 256
    $region9: #{tpu_custom_call.1} parent=1 // pred_fallthru
      _
    %v21 = vld [vmem:[#allocation2] sm:$0xff]
    %v22 = vld [vmem:[#allocation2 + $0x8] sm:$0xff]
    %v23 = vadd.f32 %v21, 1.0
    %v24 = vadd.f32 %v22, 1.0
    %25 = vst [vmem:[#allocation5] sm:$0xff] %v23
    %26 = vst [vmem:[#allocation5 + $0x8] sm:$0xff] %v24
    // Predicated region
    $region10: #{tpu_custom_call.1} parent=1 // pred_check
      _
    $region11: #{tpu_custom_call.1} parent=1 // pred_check_branch
      %28 = sbr.rel (0) target = $region13
    $region12: #{tpu_custom_call.1} parent=1 // pred_region
      %s30 = ssub.s32 256, 256
      %31 = vsyncadd [#allocation4], %s30
      %s33 = sshll.u32 [#allocation5], 4
      %s34 = int_to_ptr.vmem [resolvable:$true] %s33
      %36 = dma.vmem_to_hbm [thread:$0]  %s34, 256, %s1, [#allocation4]
    $region13: #{tpu_custom_call.1} parent=1 // pred_fallthru
      _
    // Predicated region
    $region14: #{tpu_custom_call.1} parent=1 // pred_check
      _
    $region15: #{tpu_custom_call.1} parent=1 // pred_check_branch
      %38 = sbr.rel (0) target = $region17
    $region16: #{tpu_custom_call.1} parent=1 // pred_region
      %39 = dma.done [#allocation4], 256
    $region17: #{tpu_custom_call.1} parent=1 // pred_fallthru
      _
    %40 = vsyncpa [#allocation3], 1
    %41 = vsyncpa [#allocation4], 1

</llo_original>
